<compile_context>
chip_gen: v5e
topology: v5e:2x2
jax: 0.10.0
libtpu: 0.0.40
codegen_flags: <defaults>
</compile_context>

<pallas_src>
import functools

import numpy as np
import jax
import jax.numpy as jnp
from jax.experimental import pallas as pl
from jax.experimental.pallas import tpu as pltpu


def _round_up(x: int, m: int) -> int:
    return ((x + m - 1) // m) * m


def _interp_params(n_frames: int, n_samples: int, n_samples_padded: int):
    """Reduce F.interpolate(mode='linear', align_corners=False) to per-output-sample
    (exponent, lambda) pairs for the closed-form envelope:
        out[r, s] = d_r**(x0_s + 1) * (1 + lam_s * (d_r - 1))
    """
    scale = n_frames / n_samples
    i = np.arange(n_samples)
    src = np.maximum((i + 0.5) * scale - 0.5, 0.0)
    x0 = np.minimum(np.floor(src).astype(np.int64), n_frames - 1)
    x1 = np.minimum(x0 + 1, n_frames - 1)
    lam = (src - x0).astype(np.float32)
    # where x1 clamps to x0, env[x1] == env[x0] -> effective lambda is 0
    lam = np.where(x1 == x0, 0.0, lam).astype(np.float32)
    e = (x0 + 1).astype(np.float32)
    pad = n_samples_padded - n_samples
    if pad:
        e = np.concatenate([e, np.ones((pad,), np.float32)])      # safe filler
        lam = np.concatenate([lam, np.zeros((pad,), np.float32)])
    return e.reshape(1, -1), lam.reshape(1, -1)


def _interp_matrix(n_frames: int, n_samples: int) -> np.ndarray:
    """Full (n_frames, n_samples) interp weight matrix (reference path only)."""
    scale = n_frames / n_samples
    i = np.arange(n_samples)
    src = np.maximum((i + 0.5) * scale - 0.5, 0.0)
    x0 = np.minimum(np.floor(src).astype(np.int64), n_frames - 1)
    lam = src - x0
    x1 = np.minimum(x0 + 1, n_frames - 1)
    w = np.zeros((n_frames, n_samples), dtype=np.float32)
    np.add.at(w, (x0, i), 1.0 - lam)
    np.add.at(w, (x1, i), lam)
    return w


def _envelope_kernel(decay_ref, e_ref, lam_ref, out_ref, *, base_resonance):
    # decay_ref: (row_tile, 1)  raw decay values for this row tile
    # e_ref:     (1, tile_n)    = x0_s + 1                 (float32)
    # lam_ref:   (1, tile_n)    = effective interp lambda  (0 at clamped edge)
    # out_ref:   (row_tile, tile_n)
    d_raw = decay_ref[...]                                       # (row_tile, 1)
    sig = jax.nn.sigmoid(d_raw)
    decay = base_resonance + sig * ((1.0 - base_resonance) * 0.99) + 1e-12
    logd = jnp.log(decay)                                        # (row_tile, 1)

    e = e_ref[...]                                               # (1, tile_n)
    lam = lam_ref[...]                                           # (1, tile_n)

    # env at frame x0_s:  decay ** (x0_s + 1) = exp(logd * e)    (EUP exp, VPU mul)
    base = jnp.exp(logd * e)                                     # (row_tile, tile_n)
    # (1 - lam) + lam * decay  ==  1 + lam * (decay - 1)         (fma + mul)
    out_ref[...] = base * (1.0 + lam * (decay - 1.0))


def exponential_decay_envelope(decay_values, *, base_resonance, n_frames, n_samples,
                               max_row_tile=256, max_sample_tile=8192):
    batch, n_events, _ = decay_values.shape
    rows = batch * n_events
    x = decay_values.reshape(rows, 1).astype(jnp.float32)

    # Row tiling: multiple of 8, capped at max_row_tile.
    rows_p8 = _round_up(rows, 8)
    row_tile = min(max_row_tile, rows_p8)
    rows_p = _round_up(rows, row_tile)
    if rows_p != rows:
        x = jnp.pad(x, ((0, rows_p - rows), (0, 0)))

    # Sample tiling: multiple of 128, capped at max_sample_tile.
    ns_p128 = _round_up(n_samples, 128)
    tile_n = min(max_sample_tile, ns_p128)
    ns_p = _round_up(n_samples, tile_n)

    e_np, lam_np = _interp_params(n_frames, n_samples, ns_p)
    e = jnp.asarray(e_np)
    lam = jnp.asarray(lam_np)

    kernel = functools.partial(_envelope_kernel,
                               base_resonance=float(base_resonance))

    grid = (rows_p // row_tile, ns_p // tile_n)

    out = pl.pallas_call(
        kernel,
        out_shape=jax.ShapeDtypeStruct((rows_p, ns_p), jnp.float32),
        grid=grid,
        in_specs=[
            # Tiny per-row-tile input; index (i, 0) so it is only re-fetched when
            # the row tile changes (sample axis is the inner grid axis).
            pl.BlockSpec((row_tile, 1), lambda i, j: (i, 0)),
            pl.BlockSpec((1, tile_n), lambda i, j: (0, j)),
            pl.BlockSpec((1, tile_n), lambda i, j: (0, j)),
        ],
        out_specs=pl.BlockSpec((row_tile, tile_n), lambda i, j: (i, j)),
        compiler_params=pltpu.CompilerParams(
            dimension_semantics=("parallel", "parallel"),
            vmem_limit_bytes=32 * 1024 * 1024),
    )(x, e, lam)

    return out[:rows, :n_samples].reshape(batch, n_events, n_samples)


def _reference(decay_values, *, base_resonance, n_frames, n_samples):
    """Pure-JAX reference mirroring the PyTorch code (cumsum + interp matmul)."""
    batch, n_events, _ = decay_values.shape
    d = jax.nn.sigmoid(decay_values.reshape(-1, n_events, 1).astype(jnp.float32))
    d = jnp.repeat(d, n_frames, axis=-1)
    decay = base_resonance + d * (1.0 - base_resonance) * 0.99
    decay = jnp.exp(jnp.cumsum(jnp.log(decay + 1e-12), axis=-1))
    w = jnp.asarray(_interp_matrix(n_frames, n_samples))
    return jnp.einsum("bef,fs->bes", decay, w)


if __name__ == "__main__":
    key = jax.random.PRNGKey(0)

    # Case 1: aligned shapes (batch=2, n_events=4, n_frames=16, n_samples=128).
    base_resonance = 0.5
    n_frames, n_samples = 16, 128
    batch, n_events = 2, 4
    decay_values = jax.random.normal(key, (batch, n_events, 1), dtype=jnp.float32)
    out = exponential_decay_envelope(decay_values, base_resonance=base_resonance,
                                     n_frames=n_frames, n_samples=n_samples)
    out = jax.block_until_ready(out)
    ref = _reference(decay_values, base_resonance=base_resonance,
                     n_frames=n_frames, n_samples=n_samples)
    assert out.shape == (batch, n_events, n_samples)
    np.testing.assert_allclose(np.asarray(out), np.asarray(ref),
                               rtol=1e-5, atol=1e-5)

    # Case 2: unaligned shapes exercising the padding path (rows=6, n_samples=200).
    base_resonance2 = 0.2
    n_frames2, n_samples2 = 8, 200
    batch2, n_events2 = 2, 3
    key2 = jax.random.split(key)[0]
    decay_values2 = jax.random.normal(key2, (batch2, n_events2, 1), dtype=jnp.float32)
    out2 = exponential_decay_envelope(decay_values2, base_resonance=base_resonance2,
                                      n_frames=n_frames2, n_samples=n_samples2)
    out2 = jax.block_until_ready(out2)
    ref2 = _reference(decay_values2, base_resonance=base_resonance2,
                      n_frames=n_frames2, n_samples=n_samples2)
    assert out2.shape == (batch2, n_events2, n_samples2)
    np.testing.assert_allclose(np.asarray(out2), np.asarray(ref2),
                               rtol=1e-5, atol=1e-5)

    print("KERNEL_OK")
</pallas_src>

<mosaic_0001>
module attributes {stable_mosaic.version = 11 : i64} {
  func.func @_envelope_kernel(%arg0: i32, %arg1: i32, %arg2: memref<8x1xf32, #tpu.memory_space<vmem>>, %arg3: memref<1x128xf32, #tpu.memory_space<vmem>>, %arg4: memref<1x128xf32, #tpu.memory_space<vmem>>, %arg5: memref<8x128xf32, #tpu.memory_space<vmem>>) attributes {dimension_semantics = [#tpu.dimension_semantics<parallel>, #tpu.dimension_semantics<parallel>], iteration_bounds = array<i64: 1, 1>, scalar_prefetch = 0 : i64, scratch_operands = 0 : i64, tpu.core_type = #tpu.core_type<tc>, window_params = [{transform_indices = @transform_0, window_bounds = array<i64: 8, 1>}, {transform_indices = @transform_1, window_bounds = array<i64: 1, 128>}, {transform_indices = @transform_2, window_bounds = array<i64: 1, 128>}, {transform_indices = @transform_3, window_bounds = array<i64: 8, 128>}]} {
    %c0 = arith.constant 0 : index
    %c0_0 = arith.constant 0 : index
    %0 = vector.load %arg2[%c0, %c0_0] : memref<8x1xf32, #tpu.memory_space<vmem>>, vector<8x1xf32>
    %1 = arith.negf %0 : vector<8x1xf32>
    %2 = math.exp %1 : vector<8x1xf32>
    %cst = arith.constant 1.000000e+00 : f32
    %3 = vector.broadcast %cst : f32 to vector<8x1xf32>
    %4 = arith.addf %3, %2 : vector<8x1xf32>
    %5 = arith.divf %3, %4 : vector<8x1xf32>
    %cst_1 = arith.constant 4.950000e-01 : f32
    %6 = vector.broadcast %cst_1 : f32 to vector<8x1xf32>
    %7 = arith.mulf %5, %6 : vector<8x1xf32>
    %cst_2 = arith.constant 5.000000e-01 : f32
    %8 = vector.broadcast %cst_2 : f32 to vector<8x1xf32>
    %9 = arith.addf %8, %7 : vector<8x1xf32>
    %cst_3 = arith.constant 9.99999996E-13 : f32
    %10 = vector.broadcast %cst_3 : f32 to vector<8x1xf32>
    %11 = arith.addf %9, %10 : vector<8x1xf32>
    %12 = math.log %11 : vector<8x1xf32>
    %c0_4 = arith.constant 0 : index
    %c0_5 = arith.constant 0 : index
    %13 = vector.load %arg3[%c0_4, %c0_5] : memref<1x128xf32, #tpu.memory_space<vmem>>, vector<1x128xf32>
    %c0_6 = arith.constant 0 : index
    %c0_7 = arith.constant 0 : index
    %14 = vector.load %arg4[%c0_6, %c0_7] : memref<1x128xf32, #tpu.memory_space<vmem>>, vector<1x128xf32>
    %15 = vector.broadcast %12 : vector<8x1xf32> to vector<8x128xf32>
    %16 = vector.broadcast %13 : vector<1x128xf32> to vector<8x128xf32>
    %17 = arith.mulf %15, %16 : vector<8x128xf32>
    %18 = math.exp %17 : vector<8x128xf32>
    %cst_8 = arith.constant 1.000000e+00 : f32
    %19 = vector.broadcast %cst_8 : f32 to vector<8x1xf32>
    %20 = arith.subf %11, %19 : vector<8x1xf32>
    %21 = vector.broadcast %14 : vector<1x128xf32> to vector<8x128xf32>
    %22 = vector.broadcast %20 : vector<8x1xf32> to vector<8x128xf32>
    %23 = arith.mulf %21, %22 : vector<8x128xf32>
    %cst_9 = arith.constant 1.000000e+00 : f32
    %24 = vector.broadcast %cst_9 : f32 to vector<8x128xf32>
    %25 = arith.addf %24, %23 : vector<8x128xf32>
    %26 = arith.mulf %18, %25 : vector<8x128xf32>
    %c0_10 = arith.constant 0 : index
    %c0_11 = arith.constant 0 : index
    %27 = vector.load %arg5[%c0_10, %c0_11] : memref<8x128xf32, #tpu.memory_space<vmem>>, vector<8x128xf32>
    tpu.vector_store %arg5[%c0_10, %c0_11], %26 {strides = array<i32>} : memref<8x128xf32, #tpu.memory_space<vmem>>, vector<8x128xf32>,
    return
  }
  func.func @transform_0(%arg0: i32, %arg1: i32) -> (i32, i32) {
    %c0_i32 = arith.constant 0 : i32
    %c0_i32_0 = arith.constant 0 : i32
    return %arg0, %c0_i32 : i32, i32
  }
  func.func @transform_1(%arg0: i32, %arg1: i32) -> (i32, i32) {
    %c0_i32 = arith.constant 0 : i32
    %c0_i32_0 = arith.constant 0 : i32
    return %c0_i32, %arg1 : i32, i32
  }
  func.func @transform_2(%arg0: i32, %arg1: i32) -> (i32, i32) {
    %c0_i32 = arith.constant 0 : i32
    %c0_i32_0 = arith.constant 0 : i32
    return %c0_i32, %arg1 : i32, i32
  }
  func.func @transform_3(%arg0: i32, %arg1: i32) -> (i32, i32) {
    %c0_i32 = arith.constant 0 : i32
    return %arg0, %arg1 : i32, i32
  }
}

</mosaic_0001>

<llo_original>
// kernel: tpu_custom_call.1
$region0: #{tpu_custom_call.1}
  #allocation0 [shape = 'u32[]', space=smem, size = 0x4, offset = 0x4, fixed_abs, tag = 'smem constant byte address 0x4 - core index']
  #allocation1 [shape = 'u32[72,128]{1,0:T(1,128)}', space=vmem, size = 0x9000, scoped, tag = 'internal scratch']
  %s0 = inlined_call_operand.vmem [shape: f32[8,1], index: 0, kind: input, shape index: {}]
  %s1 = inlined_call_operand.vmem [shape: f32[1,128], index: 1, kind: input, shape index: {}]
  %s2 = inlined_call_operand.vmem [shape: f32[1,128], index: 2, kind: input, shape index: {}]
  %s3 = inlined_call_operand.hbm [shape: f32[8,128], index: 3, kind: output, shape index: {}]
  %s4 = sld [smem:[#allocation0]]
  $region22: #{tpu_custom_call.1} parent=0
    _
  %s6 = ssub.s32 1, %s4
  %s7 = scalar_select 0, %s6, %s4
  $region1: #{tpu_custom_call.1} parent=0
    #allocation2 [shape = 'u8[4096]{0}', space=vmem, size = 0x1000, scoped, tag = 'output window, operand 0, single buffered']
    #allocation3 [shape = 's32[1]{0}', space=sflag, size = 0x4, scoped, tag = 'scoped memory for tpu_custom_call.1']
    %8 = vsyncpa [#allocation3], 0
    // Predicated region
    $region2: #{tpu_custom_call.1} parent=1 // pred_check
      _
    $region3: #{tpu_custom_call.1} parent=1 // pred_check_branch
      %10 = sbr.rel (0) target = $region5
    $region4: #{tpu_custom_call.1} parent=1 // pred_region
      _
    $region5: #{tpu_custom_call.1} parent=1 // pred_fallthru
      _
    // Predicated region
    $region6: #{tpu_custom_call.1} parent=1 // pred_check
      _
    $region7: #{tpu_custom_call.1} parent=1 // pred_check_branch
      %12 = sbr.rel (0) target = $region9
    $region8: #{tpu_custom_call.1} parent=1 // pred_region
      _
    $region9: #{tpu_custom_call.1} parent=1 // pred_fallthru
      _
    // Predicated region
    $region10: #{tpu_custom_call.1} parent=1 // pred_check
      _
    $region11: #{tpu_custom_call.1} parent=1 // pred_check_branch
      %14 = sbr.rel (0) target = $region13
    $region12: #{tpu_custom_call.1} parent=1 // pred_region
      _
    $region13: #{tpu_custom_call.1} parent=1 // pred_fallthru
      _
    %v15 = vld [vmem:[%s0] sm:$0xff]
    %v16 = vxor.u32 %v15, 2147483648
    %v17 = vmul.f32 %v16, 1.442695
    %v18 = vpow.pop %v17
    %v19 = vadd.f32 %v18, 1.0
    %v20 = vrcp.pop %v19
    %v21 = vmul.f32 %v19, %v20
    %v22 = vsub.f32 1.0, %v21
    %v23 = vmul.f32 %v20, %v22
    %v24 = vadd.f32 %v20, %v23
    %vm25 = vweird.f32 %v19
    %vm26 = vweird.f32 %v20
    %vm27 = vmor %vm25, %vm26
    %v28 = vsel %vm27, %v20, %v24
    %v29 = vand.u32 2147483647, %v19
    %vm30 = vcmp.eq.f32.partialorder %v29, 8.507059e+37
    %v31 = vand.u32 %v19, 2147483648
    %v32 = vor.u32 1.1754944e-38, %v31
    %v33 = vsel %vm30, %v32, %v28
    %v34 = vmul.f32 1.0, %v33
    %v35 = vmul.f32 %v34, 0.495
    %v36 = vadd.f32 %v35, 0.5
    %v37 = vadd.f32 %v36, 1e-12
    %v38 = vlog2.pop %v37
    %v39 = vmul.f32 %v38, 0.6931472
    %v40 = vld [vmem:[%s1] sm:$0x1]
    %v41 = vld [vmem:[%s2] sm:$0x1]
    %43 = vset.pattern.permute.xlu0 0
    %44 = vperm.xlu0 %43, %v39
    %v45 = vpop.permute.xlu0 %44
    %v48 = vperm.slane %v40, 0
    %v50 = vmul.f32 %v45, %v48
    %v51 = vmul.f32 %v50, 1.442695
    %v52 = vpow.pop %v51
    %v53 = vsub.f32 %v37, 1.0
    %v55 = vperm.slane %v41, 0
    %58 = vset.pattern.permute.xlu0 0
    %59 = vperm.xlu0 %58, %v53
    %v60 = vpop.permute.xlu0 %59
    %v62 = vmul.f32 %v55, %v60
    %v63 = vadd.f32 %v62, 1.0
    %v64 = vmul.f32 %v52, %v63
    %65 = vst [vmem:[#allocation2] sm:$0xff] %v64
    // Predicated region
    $region14: #{tpu_custom_call.1} parent=1 // pred_check
      _
    $region15: #{tpu_custom_call.1} parent=1 // pred_check_branch
      %67 = sbr.rel (0) target = $region17
    $region16: #{tpu_custom_call.1} parent=1 // pred_region
      %69 = vsyncadd [#allocation3], 0
      %s71 = sshll.u32 [#allocation2], 4
      %s72 = int_to_ptr.vmem [resolvable:$true] %s71
      %s73 = sshll.u32 %s3, 4
      %s74 = int_to_ptr.hbm [resolvable:$true] %s73
      %76 = dma.vmem_to_hbm [thread:$0]  %s72, 128, %s74, [#allocation3]
    $region17: #{tpu_custom_call.1} parent=1 // pred_fallthru
      _
    // Predicated region
    $region18: #{tpu_custom_call.1} parent=1 // pred_check
      _
    $region19: #{tpu_custom_call.1} parent=1 // pred_check_branch
      %78 = sbr.rel (0) target = $region21
    $region20: #{tpu_custom_call.1} parent=1 // pred_region
      %80 = dma.done [#allocation3], 128
    $region21: #{tpu_custom_call.1} parent=1 // pred_fallthru
      _
    %81 = vsyncpa [#allocation3], 1

</llo_original>
